<compile_context>
chip_gen: v7x
topology: tpu7x:2x2x1
jax: 0.10.0
libtpu: 0.0.40
codegen_flags: <defaults>
</compile_context>

<pallas_src>
import functools
import math

import jax
import jax.numpy as jnp
from jax import lax
from jax.experimental import pallas as pl
from jax.experimental.pallas import tpu as pltpu


def mi_kernel(xy_ref, w1_ref, w2_ref, tgt_ref, out_ref, *, B, ED, inv_p, log_desired):
    # ---- fused two-layer MLPs: h-path on y (rows 0..B-1), g-path on x (rows B..2B-1) ----
    xy = xy_ref[0]                                            # (2B, D+1) bf16; last col == 1
    a1 = jnp.dot(xy, w1_ref[...], preferred_element_type=jnp.float32)
    a1 = jnp.maximum(a1, 0.0).astype(jnp.bfloat16)            # relu; bias-carrier col stays 1
    a2 = jnp.dot(a1, w2_ref[...], preferred_element_type=jnp.float32)   # (2B, 2ED) f32
    h = a2[:B, :ED]                                           # h2(relu(h1(y)))   (B, ED)
    g = a2[B:, ED:]                                           # g2(relu(g1(x)))   (B, ED)

    # ---- scores and torch's column-broadcast max subtraction --------------------------
    dn = (((1,), (1,)), ((), ()))
    scores = lax.dot_general(h, g, dn, preferred_element_type=jnp.float32)    # (B,B) h@g.T
    scores_t = lax.dot_general(g, h, dn, preferred_element_type=jnp.float32)  # scores.T (MXU)
    col_max = jnp.max(scores_t, axis=0, keepdims=True)        # (1,B): row-max as a lane row
    s = scores - col_max                                      # reproduces `scores -= max_scores`

    # ---- one-hot machinery from the (B,1) target column (iota compares, no gathers) ----
    # (requires 0 <= target[i] < B, as in the torch gather semantics)
    tgt = tgt_ref[0]                                          # (B,1) int32
    row_ids = lax.broadcasted_iota(jnp.int32, (B, B), 0)
    col_ids = lax.broadcasted_iota(jnp.int32, (B, B), 1)
    onehot = col_ids == tgt                                   # onehot[i,j] = (target[i] == j)
    onehot_f = jnp.where(onehot, 1.0, 0.0)

    count_row = jnp.sum(onehot_f, axis=0, keepdims=True)      # (1,B): #{i : target[i] == j}
    col_in_target = count_row > 0.0                           # (1,B): column hit by any target
    # count as a (B,1) column without an XLU transpose: diagonal mask + lane reduce
    diag = row_ids == col_ids
    count_col = jnp.sum(jnp.where(diag, count_row, 0.0), axis=1, keepdims=True)   # (B,1)

    # ---- importance-sampled log-softmax; smax never materialized ----------------------
    sum_tgt = jnp.sum(jnp.where(onehot, s, 0.0))              # sum_i s[i, target[i]]
    s0 = s[0:1, :]                                            # (1,B) row 0
    # ens = exp(s - eye)/(p+1e-6); eye kills row-0 entries in target columns (exp -> 0)
    correction = jnp.sum(jnp.where(col_in_target, jnp.exp(s0), 0.0))
    sum_ens = (jnp.sum(jnp.exp(s)) - correction) * inv_p      # scalar

    ps_col = jnp.sum(jnp.where(onehot, s0, 0.0), axis=1, keepdims=True)  # ps[k]=s[0,target[k]]
    log_z = jnp.log(sum_ens + jnp.exp(ps_col))                # (B,1): log partition[k]
    s2 = jnp.sum(count_col * log_z)                           # sum_i log partition[target[i]]

    nll = (sum_tgt - s2) * (1.0 / B)
    mi = log_desired + nll
    out_ref[0] = jnp.full((1, 1), mi, jnp.float32)


def pack_params(params):
    """Hoisted, once-per-params packing of the fused bf16 MXU operands.

    layer 1:  [y; x | 1] (2B, D+1)  @  [[h1w | g1w | 0], [h1b | g1b | 1]]  (D+1, 2HD+1)
    layer 2:  block-diag(h2w, g2w) with the bias row appended               (2HD+1, 2ED)
    """
    f32 = jnp.float32
    h1w, g1w = params["h1w"], params["g1w"]
    h2w, g2w = params["h2w"], params["g2w"]
    D, HD = h1w.shape
    ED = h2w.shape[1]

    top = jnp.concatenate([h1w, g1w, jnp.zeros((D, 1), f32)], axis=1)
    bot = jnp.concatenate([params["h1b"], params["g1b"], jnp.ones((1, 1), f32)], axis=1)
    w1_aug = jnp.concatenate([top, bot], axis=0).astype(jnp.bfloat16)        # (D+1, 2HD+1)

    z = jnp.zeros((HD, ED), f32)
    blk = jnp.concatenate([jnp.concatenate([h2w, z], axis=1),
                           jnp.concatenate([z, g2w], axis=1)], axis=0)       # (2HD, 2ED)
    b2 = jnp.concatenate([params["h2b"], params["g2b"]], axis=1)             # (1, 2ED)
    w2_aug = jnp.concatenate([blk, b2], axis=0).astype(jnp.bfloat16)         # (2HD+1, 2ED)
    return w1_aug, w2_aug


@functools.partial(jax.jit, static_argnames=("desired_batch_size",))
def mi_forward_stacked(w1_aug, w2_aug, x, y, target, *, desired_batch_size):
    """G independent estimator evaluations in ONE pallas_call (grid over instances)."""
    G, B, D = x.shape
    assert w1_aug.shape[0] == D + 1, "packed weights do not match input feature dim"
    ED = w2_aug.shape[1] // 2

    # Per-call prep (the only host-side work that must run every call).
    xy = jnp.concatenate([y, x], axis=1)                                     # (G, 2B, D)
    xy_aug = jnp.concatenate([xy, jnp.ones((G, 2 * B, 1), xy.dtype)],
                             axis=2).astype(jnp.bfloat16)                    # (G, 2B, D+1)
    tgt = target.astype(jnp.int32).reshape(G, B, 1)

    p = float(B) / float(desired_batch_size)        # module assumes N == B (square scores)
    inv_p = 1.0 / (p + 1e-6)
    log_desired = math.log(float(desired_batch_size))

    kernel = functools.partial(mi_kernel, B=B, ED=ED, inv_p=inv_p,
                               log_desired=log_desired)

    out = pl.pallas_call(
        kernel,
        out_shape=jax.ShapeDtypeStruct((G, 1, 1), jnp.float32),
        grid=(G,),
        in_specs=[
            pl.BlockSpec((1, 2 * B, D + 1), lambda i: (i, 0, 0)),   # per-instance [y;x|1]
            pl.BlockSpec(w1_aug.shape, lambda i: (0, 0)),           # shared weights: one DMA
            pl.BlockSpec(w2_aug.shape, lambda i: (0, 0)),
            pl.BlockSpec((1, B, 1), lambda i: (i, 0, 0)),           # per-instance targets
        ],
        out_specs=pl.BlockSpec((1, 1, 1), lambda i: (i, 0, 0)),
        compiler_params=pltpu.CompilerParams(
            dimension_semantics=("parallel",)),                     # both TCs on v7x
    )(xy_aug, w1_aug, w2_aug, tgt)
    return out.reshape(G)


def mi_estimator_forward(packed, x, y, target, desired_batch_size):
    """Single (x, y, target) evaluation -> shape-(1,) array, like the torch module."""
    w1_aug, w2_aug = packed
    return mi_forward_stacked(w1_aug, w2_aug, x[None], y[None], target[None],
                              desired_batch_size=desired_batch_size)


def mi_estimator_forward_batched(packed, x, y, target, desired_batch_size):
    """G independent (x, y, target) triples evaluated by one kernel launch."""
    w1_aug, w2_aug = packed
    return mi_forward_stacked(w1_aug, w2_aug, x, y, target,
                              desired_batch_size=desired_batch_size)


def ref_forward(params, x, y, target, desired):
    """Pure-JAX f32 reference of the PyTorch forward (same buggy broadcasts)."""
    h = jnp.maximum(y @ params["h1w"] + params["h1b"], 0.0) @ params["h2w"] + params["h2b"]
    g = jnp.maximum(x @ params["g1w"] + params["g1b"], 0.0) @ params["g2w"] + params["g2b"]
    scores = h @ g.T
    B, N = scores.shape
    p = jnp.float32(N) / jnp.float32(desired)
    max_scores = jnp.max(scores, axis=1)                  # [B]
    scores = scores - max_scores[None, :]                 # torch broadcast across columns
    eye = jnp.zeros_like(scores).at[0, target].set(1e38)
    ps = scores[0, target]                                # [B]
    ns = scores - eye
    eps = jnp.exp(ps)
    ens = jnp.exp(ns) / (p + 1e-6)
    partition = jnp.sum(ens) + eps                        # [B]
    smax = scores - jnp.log(partition)[None, :]           # torch broadcast across columns
    nll = jnp.mean(smax[jnp.arange(B), target])
    return jnp.log(jnp.float32(desired)) + nll


def init_params(key, D, HD, ED):
    """Deterministic PyTorch-style (U[-1/sqrt(fan_in), 1/sqrt(fan_in)]) init."""
    ks = jax.random.split(key, 8)

    def lin(kw, kb, fan_in, fan_out):
        bound = 1.0 / math.sqrt(fan_in)
        w = jax.random.uniform(kw, (fan_in, fan_out), jnp.float32, -bound, bound)
        b = jax.random.uniform(kb, (1, fan_out), jnp.float32, -bound, bound)
        return w, b

    h1w, h1b = lin(ks[0], ks[1], D, HD)
    h2w, h2b = lin(ks[2], ks[3], HD, ED)
    g1w, g1b = lin(ks[4], ks[5], D, HD)
    g2w, g2b = lin(ks[6], ks[7], D, HD) if False else lin(ks[6], ks[7], HD, ED)
    # fn1 / fn2 exist in __init__ but are unused in forward(); omitted here.
    return dict(h1w=h1w, h1b=h1b, h2w=h2w, h2b=h2b,
                g1w=g1w, g1b=g1b, g2w=g2w, g2b=g2b)


if __name__ == "__main__":
    key = jax.random.PRNGKey(0)
    B, D, HD, ED = 8, 32, 32, 16       # module requires scores to be square (N == B)
    desired_batch_size = 4
    G = 3                              # independent estimator evaluations per launch

    kp, kd = jax.random.split(key)
    params = init_params(kp, D, HD, ED)
    packed = jax.block_until_ready(pack_params(params))   # hoisted: once per params

    kx, ky, kt = jax.random.split(kd, 3)
    xs = jax.random.normal(kx, (G, B, D), jnp.float32)
    ys = jax.random.normal(ky, (G, B, D), jnp.float32)
    ts = jax.random.randint(kt, (G, B), 0, B, jnp.int32)
    # torch gather semantics require in-range targets; the iota one-hot would silently
    # produce all-zero rows otherwise.
    assert int(ts.min()) >= 0 and int(ts.max()) < B

    # Single-instance path (matches torch forward(): returns a shape-[1] tensor).
    mi1 = jax.block_until_ready(
        mi_estimator_forward(packed, xs[0], ys[0], ts[0], desired_batch_size))
    ref1 = ref_forward(params, xs[0], ys[0], ts[0], desired_batch_size)
    assert jnp.allclose(mi1[0], ref1, atol=1e-2, rtol=1e-2), (mi1, ref1)

    # Batched path: G independent evaluations in one pallas_call / one grid.
    mig = jax.block_until_ready(
        mi_estimator_forward_batched(packed, xs, ys, ts, desired_batch_size))
    for i in range(G):
        ri = ref_forward(params, xs[i], ys[i], ts[i], desired_batch_size)
        assert jnp.allclose(mig[i], ri, atol=1e-2, rtol=1e-2), (i, mig[i], ri)

    print("KERNEL_OK")
</pallas_src>

<mosaic_0001>
module attributes {stable_mosaic.version = 11 : i64} {
  func.func @mi_kernel(%arg0: i32, %arg1: memref<1x16x33xbf16, #tpu.memory_space<vmem>>, %arg2: memref<33x65xbf16, #tpu.memory_space<vmem>>, %arg3: memref<65x32xbf16, #tpu.memory_space<vmem>>, %arg4: memref<1x8x1xi32, #tpu.memory_space<vmem>>, %arg5: memref<1x1x1xf32, #tpu.memory_space<vmem>>) attributes {dimension_semantics = [#tpu.dimension_semantics<parallel>], iteration_bounds = array<i64: 1>, scalar_prefetch = 0 : i64, scratch_operands = 0 : i64, tpu.core_type = #tpu.core_type<tc>, window_params = [{transform_indices = @transform_0, window_bounds = array<i64: 1, 16, 33>}, {pipeline_mode = #tpu.pipeline_mode<synchronous>, transform_indices = @transform_1, window_bounds = array<i64: 33, 65>}, {pipeline_mode = #tpu.pipeline_mode<synchronous>, transform_indices = @transform_2, window_bounds = array<i64: 65, 32>}, {transform_indices = @transform_3, window_bounds = array<i64: 1, 8, 1>}, {transform_indices = @transform_4, window_bounds = array<i64: 1, 1, 1>}]} {
    %c0 = arith.constant 0 : index
    %c0_0 = arith.constant 0 : index
    %c0_1 = arith.constant 0 : index
    %0 = vector.load %arg1[%c0, %c0_0, %c0_1] : memref<1x16x33xbf16, #tpu.memory_space<vmem>>, vector<1x16x33xbf16>
    %1 = vector.shape_cast %0 : vector<1x16x33xbf16> to vector<16x33xbf16>
    %c0_2 = arith.constant 0 : index
    %c0_3 = arith.constant 0 : index
    %2 = vector.load %arg2[%c0_2, %c0_3] : memref<33x65xbf16, #tpu.memory_space<vmem>>, vector<33x65xbf16>
    %cst = arith.constant dense<0.000000e+00> : vector<16x65xf32>
    %3 = tpu.matmul %1, %2, %cst {dimension_numbers = #tpu.dot_dimension_numbers<[1], [0], [0], [1], [0, 0, 1, 1], [], []>} : vector<16x33xbf16>, vector<33x65xbf16>, vector<16x65xf32> -> vector<16x65xf32>
    %cst_4 = arith.constant 0.000000e+00 : f32
    %4 = vector.broadcast %cst_4 : f32 to vector<16x65xf32>
    %5 = arith.maximumf %3, %4 : vector<16x65xf32>
    %6 = arith.truncf %5 : vector<16x65xf32> to vector<16x65xbf16>
    %c0_5 = arith.constant 0 : index
    %c0_6 = arith.constant 0 : index
    %7 = vector.load %arg3[%c0_5, %c0_6] : memref<65x32xbf16, #tpu.memory_space<vmem>>, vector<65x32xbf16>
    %cst_7 = arith.constant dense<0.000000e+00> : vector<16x32xf32>
    %8 = tpu.matmul %6, %7, %cst_7 {dimension_numbers = #tpu.dot_dimension_numbers<[1], [0], [0], [1], [0, 0, 1, 1], [], []>} : vector<16x65xbf16>, vector<65x32xbf16>, vector<16x32xf32> -> vector<16x32xf32>
    %9 = vector.extract_strided_slice %8 {offsets = [0, 0], sizes = [8, 16], strides = [1, 1]} : vector<16x32xf32> to vector<8x16xf32>
    %10 = vector.extract_strided_slice %8 {offsets = [8, 16], sizes = [8, 16], strides = [1, 1]} : vector<16x32xf32> to vector<8x16xf32>
    %cst_8 = arith.constant dense<0.000000e+00> : vector<8x8xf32>
    %11 = tpu.matmul %9, %10, %cst_8 {dimension_numbers = #tpu.dot_dimension_numbers<[1], [1], [0], [0], [0, 0, 1, 0], [], []>} : vector<8x16xf32>, vector<8x16xf32>, vector<8x8xf32> -> vector<8x8xf32>
    %cst_9 = arith.constant dense<0.000000e+00> : vector<8x8xf32>
    %12 = tpu.matmul %10, %9, %cst_9 {dimension_numbers = #tpu.dot_dimension_numbers<[1], [1], [0], [0], [0, 0, 1, 0], [], []>} : vector<8x16xf32>, vector<8x16xf32>, vector<8x8xf32> -> vector<8x8xf32>
    %cst_10 = arith.constant dense<0xFF800000> : vector<8xf32>
    %13 = vector.multi_reduction <maximumf>, %12, %cst_10 [0] : vector<8x8xf32> to vector<8xf32>
    %14 = vector.shape_cast %13 : vector<8xf32> to vector<1x8xf32>
    %15 = vector.broadcast %14 : vector<1x8xf32> to vector<8x8xf32>
    %16 = arith.subf %11, %15 : vector<8x8xf32>
    %c0_11 = arith.constant 0 : index
    %c0_12 = arith.constant 0 : index
    %c0_13 = arith.constant 0 : index
    %17 = vector.load %arg4[%c0_11, %c0_12, %c0_13] : memref<1x8x1xi32, #tpu.memory_space<vmem>>, vector<1x8x1xi32>
    %18 = vector.shape_cast %17 : vector<1x8x1xi32> to vector<8x1xi32>
    %19 = tpu.iota {dimensions = array<i32: 0>} : vector<8x8xi32>
    %20 = tpu.iota {dimensions = array<i32: 1>} : vector<8x8xi32>
    %21 = vector.broadcast %18 : vector<8x1xi32> to vector<8x8xi32>
    %22 = arith.cmpi eq, %20, %21 : vector<8x8xi32>
    %cst_14 = arith.constant 1.000000e+00 : f32
    %cst_15 = arith.constant 0.000000e+00 : f32
    %23 = vector.broadcast %cst_14 : f32 to vector<8x8xf32>
    %24 = vector.broadcast %cst_15 : f32 to vector<8x8xf32>
    %25 = arith.select %22, %23, %24 : vector<8x8xi1>, vector<8x8xf32>
    %cst_16 = arith.constant dense<0.000000e+00> : vector<8xf32>
    %26 = vector.multi_reduction <add>, %25, %cst_16 [0] : vector<8x8xf32> to vector<8xf32>
    %27 = vector.shape_cast %26 : vector<8xf32> to vector<1x8xf32>
    %cst_17 = arith.constant 0.000000e+00 : f32
    %28 = vector.broadcast %cst_17 : f32 to vector<1x8xf32>
    %29 = arith.cmpf ogt, %27, %28 : vector<1x8xf32>
    %30 = arith.cmpi eq, %19, %20 : vector<8x8xi32>
    %cst_18 = arith.constant 0.000000e+00 : f32
    %31 = vector.shape_cast %27 : vector<1x8xf32> to vector<1x8xf32>
    %32 = vector.broadcast %31 : vector<1x8xf32> to vector<8x8xf32>
    %33 = vector.broadcast %cst_18 : f32 to vector<8x8xf32>
    %34 = arith.select %30, %32, %33 : vector<8x8xi1>, vector<8x8xf32>
    %cst_19 = arith.constant dense<0.000000e+00> : vector<8xf32>
    %35 = vector.multi_reduction <add>, %34, %cst_19 [1] : vector<8x8xf32> to vector<8xf32>
    %36 = vector.shape_cast %35 : vector<8xf32> to vector<8x1xf32>
    %cst_20 = arith.constant 0.000000e+00 : f32
    %37 = vector.broadcast %cst_20 : f32 to vector<8x8xf32>
    %38 = arith.select %22, %16, %37 : vector<8x8xi1>, vector<8x8xf32>
    %39 = vector.shape_cast %38 : vector<8x8xf32> to vector<1x8x8xf32>
    %cst_21 = arith.constant dense<0.000000e+00> : vector<1xf32>
    %40 = vector.multi_reduction <add>, %39, %cst_21 [1, 2] : vector<1x8x8xf32> to vector<1xf32>
    %41 = vector.shape_cast %40 : vector<1xf32> to vector<1x1x1xf32>
    %42 = vector.extract %41[0, 0, 0] : f32 from vector<1x1x1xf32>
    %43 = vector.extract_strided_slice %16 {offsets = [0, 0], sizes = [1, 8], strides = [1, 1]} : vector<8x8xf32> to vector<1x8xf32>
    %44 = math.exp %43 : vector<1x8xf32>
    %cst_22 = arith.constant 0.000000e+00 : f32
    %45 = vector.broadcast %cst_22 : f32 to vector<1x8xf32>
    %46 = arith.select %29, %44, %45 : vector<1x8xi1>, vector<1x8xf32>
    %47 = vector.shape_cast %46 : vector<1x8xf32> to vector<1x1x8xf32>
    %cst_23 = arith.constant dense<0.000000e+00> : vector<1xf32>
    %48 = vector.multi_reduction <add>, %47, %cst_23 [1, 2] : vector<1x1x8xf32> to vector<1xf32>
    %49 = vector.shape_cast %48 : vector<1xf32> to vector<1x1x1xf32>
    %50 = vector.extract %49[0, 0, 0] : f32 from vector<1x1x1xf32>
    %51 = math.exp %16 : vector<8x8xf32>
    %52 = vector.shape_cast %51 : vector<8x8xf32> to vector<1x8x8xf32>
    %cst_24 = arith.constant dense<0.000000e+00> : vector<1xf32>
    %53 = vector.multi_reduction <add>, %52, %cst_24 [1, 2] : vector<1x8x8xf32> to vector<1xf32>
    %54 = vector.shape_cast %53 : vector<1xf32> to vector<1x1x1xf32>
    %55 = vector.extract %54[0, 0, 0] : f32 from vector<1x1x1xf32>
    %56 = arith.subf %55, %50 : f32
    %cst_25 = arith.constant 0.499999762 : f32
    %57 = arith.mulf %56, %cst_25 : f32
    %cst_26 = arith.constant 0.000000e+00 : f32
    %58 = vector.shape_cast %43 : vector<1x8xf32> to vector<1x8xf32>
    %59 = vector.broadcast %58 : vector<1x8xf32> to vector<8x8xf32>
    %60 = vector.broadcast %cst_26 : f32 to vector<8x8xf32>
    %61 = arith.select %22, %59, %60 : vector<8x8xi1>, vector<8x8xf32>
    %cst_27 = arith.constant dense<0.000000e+00> : vector<8xf32>
    %62 = vector.multi_reduction <add>, %61, %cst_27 [1] : vector<8x8xf32> to vector<8xf32>
    %63 = vector.shape_cast %62 : vector<8xf32> to vector<8x1xf32>
    %64 = math.exp %63 : vector<8x1xf32>
    %65 = vector.broadcast %57 : f32 to vector<8x1xf32>
    %66 = arith.addf %65, %64 : vector<8x1xf32>
    %67 = math.log %66 : vector<8x1xf32>
    %68 = arith.mulf %36, %67 : vector<8x1xf32>
    %69 = vector.shape_cast %68 : vector<8x1xf32> to vector<1x8x1xf32>
    %cst_28 = arith.constant dense<0.000000e+00> : vector<1xf32>
    %70 = vector.multi_reduction <add>, %69, %cst_28 [1, 2] : vector<1x8x1xf32> to vector<1xf32>
    %71 = vector.shape_cast %70 : vector<1xf32> to vector<1x1x1xf32>
    %72 = vector.extract %71[0, 0, 0] : f32 from vector<1x1x1xf32>
    %73 = arith.subf %42, %72 : f32
    %cst_29 = arith.constant 1.250000e-01 : f32
    %74 = arith.mulf %73, %cst_29 : f32
    %cst_30 = arith.constant 1.38629436 : f32
    %75 = arith.addf %cst_30, %74 : f32
    %76 = vector.broadcast %75 : f32 to vector<1x1xf32>
    %c0_31 = arith.constant 0 : index
    %c0_32 = arith.constant 0 : index
    %c0_33 = arith.constant 0 : index
    %77 = vector.load %arg5[%c0_31, %c0_32, %c0_33] : memref<1x1x1xf32, #tpu.memory_space<vmem>>, vector<1x1x1xf32>
    %78 = vector.shape_cast %77 : vector<1x1x1xf32> to vector<1x1xf32>
    %79 = vector.shape_cast %76 : vector<1x1xf32> to vector<1x1x1xf32>
    tpu.vector_store %arg5[%c0_31, %c0_32, %c0_33], %79 {strides = array<i32>} : memref<1x1x1xf32, #tpu.memory_space<vmem>>, vector<1x1x1xf32>,
    return
  }
  func.func @transform_0(%arg0: i32) -> (i32, i32, i32) {
    %c0_i32 = arith.constant 0 : i32
    %c0_i32_0 = arith.constant 0 : i32
    %c0_i32_1 = arith.constant 0 : i32
    return %arg0, %c0_i32, %c0_i32_0 : i32, i32, i32
  }
  func.func @transform_1(%arg0: i32) -> (i32, i32) {
    %c0_i32 = arith.constant 0 : i32
    %c0_i32_0 = arith.constant 0 : i32
    %c0_i32_1 = arith.constant 0 : i32
    return %c0_i32, %c0_i32_0 : i32, i32
  }
  func.func @transform_2(%arg0: i32) -> (i32, i32) {
    %c0_i32 = arith.constant 0 : i32
    %c0_i32_0 = arith.constant 0 : i32
    %c0_i32_1 = arith.constant 0 : i32
    return %c0_i32, %c0_i32_0 : i32, i32
  }
  func.func @transform_3(%arg0: i32) -> (i32, i32, i32) {
    %c0_i32 = arith.constant 0 : i32
    %c0_i32_0 = arith.constant 0 : i32
    %c0_i32_1 = arith.constant 0 : i32
    return %arg0, %c0_i32, %c0_i32_0 : i32, i32, i32
  }
  func.func @transform_4(%arg0: i32) -> (i32, i32, i32) {
    %c0_i32 = arith.constant 0 : i32
    %c0_i32_0 = arith.constant 0 : i32
    %c0_i32_1 = arith.constant 0 : i32
    return %arg0, %c0_i32, %c0_i32_0 : i32, i32, i32
  }
}

</mosaic_0001>

<llo_original>
// kernel: mi_forward_stacked.1
$region0: #{mi_forward_stacked.1}
  #allocation0 [shape = 'u32[]', space=smem, size = 0x4, offset = 0x4, fixed_abs, tag = 'smem constant byte address 0x4 - core index']
  #allocation1 [shape = 'u32[144,128]{1,0:T(1,128)}', space=vmem, size = 0x12000, scoped, tag = 'internal scratch']
  %s0 = inlined_call_operand.vmem [shape: bf16[1,16,33], index: 0, kind: input, shape index: {}]
  %s1 = inlined_call_operand.vmem [shape: bf16[33,65], index: 1, kind: input, shape index: {}]
  %s2 = inlined_call_operand.vmem [shape: bf16[65,32], index: 2, kind: input, shape index: {}]
  %s3 = inlined_call_operand.vmem [shape: s32[1,8,1], index: 3, kind: input, shape index: {}]
  %s4 = inlined_call_operand.hbm [shape: f32[1,1,1], index: 4, kind: output, shape index: {}]
  %s5 = sld [smem:[#allocation0]]
  $region26: #{mi_forward_stacked.1} parent=0
    _
  %s7 = ssub.s32 1, %s5
  %s8 = scalar_select 0, %s7, %s5
  $region1: #{mi_forward_stacked.1} parent=0
    #allocation2 [shape = 'u8[512]{0}', space=vmem, size = 0x400, scoped, tag = 'output window, operand 0, single buffered']
    #allocation3 [shape = 's32[1]{0}', space=sflag, size = 0x4, scoped, tag = 'scoped memory for mi_forward_stacked.1']
    %9 = vsyncpa [#allocation3], 0
    // Predicated region
    $region2: #{mi_forward_stacked.1} parent=1 // pred_check
      _
    $region3: #{mi_forward_stacked.1} parent=1 // pred_check_branch
      %11 = sbr.rel (0) target = $region5
    $region4: #{mi_forward_stacked.1} parent=1 // pred_region
      _
    $region5: #{mi_forward_stacked.1} parent=1 // pred_fallthru
      _
    // Predicated region
    $region6: #{mi_forward_stacked.1} parent=1 // pred_check
      _
    $region7: #{mi_forward_stacked.1} parent=1 // pred_check_branch
      %13 = sbr.rel (0) target = $region9
    $region8: #{mi_forward_stacked.1} parent=1 // pred_region
      _
    $region9: #{mi_forward_stacked.1} parent=1 // pred_fallthru
      _
    // Predicated region
    $region10: #{mi_forward_stacked.1} parent=1 // pred_check
      _
    $region11: #{mi_forward_stacked.1} parent=1 // pred_check_branch
      %15 = sbr.rel (0) target = $region13
    $region12: #{mi_forward_stacked.1} parent=1 // pred_region
      _
    $region13: #{mi_forward_stacked.1} parent=1 // pred_fallthru
      _
    // Predicated region
    $region14: #{mi_forward_stacked.1} parent=1 // pred_check
      _
    $region15: #{mi_forward_stacked.1} parent=1 // pred_check_branch
      %17 = sbr.rel (0) target = $region17
    $region16: #{mi_forward_stacked.1} parent=1 // pred_region
      _
    $region17: #{mi_forward_stacked.1} parent=1 // pred_fallthru
      _
    %v19 = vld [vmem:[%s0] sm:$0xf]
    %v20 = vld [vmem:[%s0 + $0x4] sm:$0xf]
    %v21 = vld [vmem:[%s1] sm:$0xf]
    %v22 = vld [vmem:[%s1 + $0x4] sm:$0xf]
    %v23 = vld [vmem:[%s1 + $0x8] sm:$0xf]
    %v24 = vld [vmem:[%s1 + $0xc] sm:$0xf]
    %v25 = vld [vmem:[%s1 + $0x10] sm:$0x1]
    %v28 = vunpack.c.l.b16 %v19
    %v29 = vunpack.c.l.b16 %v20
    %v30 = vpack.c.b16 %v29, %v28
    %v36 = vunpack.c.l.b16 %v21
    %v37 = vunpack.c.l.b16 %v22
    %v38 = vunpack.c.l.b16 %v23
    %v39 = vunpack.c.l.b16 %v24
    %v40 = vunpack.c.l.b16 %v25
    %v41 = vpack.c.b16 %v37, %v36
    %v42 = vpack.c.b16 %v39, %v38
    %v43 = vpack.c.b16 %v40, %v40
    %vm46 = vcmask 269312
    %v48 = vsel %vm46, %v30, 0
    %vm50 = vcmask 1040384
    %v51 = vsel 0, 4294967295, 65535
    %v52 = vsel %vm50, %v51, 0
    %v54 = vand.u32 %v43, %v52
    %56 = vmatprep.subr.bf16.mxu0 0
    %57 = vmatpush1.bf16.msra.mxu0 %v41
    %58 = vmatprep.subr.bf16.mxu0 0
    %59 = vmatpush1.bf16.msra.mxu0 %v42
    %60 = vmatprep.subr.bf16.mxu0 0
    %61 = vmatpush1.bf16.msra.mxu0 %v54
    %62 = vmatprep.subr.bf16.mxu0 0
    %63 = vmatpush1.bf16.msra.mxu0 0
    %64 = vmatprep.subr.bf16.mxu0 0
    %65 = vmatpush1.bf16.msra.mxu0 0
    %66 = vmatprep.subr.bf16.mxu0 0
    %67 = vmatpush1.bf16.msra.mxu0 0
    %68 = vmatprep.subr.bf16.mxu0 0
    %69 = vmatpush1.bf16.msra.mxu0 0
    %70 = vmatprep.subr.bf16.mxu0 0
    %71 = vmatpush1.bf16.msra.mxu0 0
    %72 = vmatprep.subr.bf16.mxu0 0
    %73 = vmatpush1.bf16.msra.mxu0 0
    %74 = vmatprep.subr.bf16.mxu0 0
    %75 = vmatpush1.bf16.msra.mxu0 0
    %76 = vmatprep.subr.bf16.mxu0 0
    %77 = vmatpush1.bf16.msra.mxu0 0
    %78 = vmatprep.subr.bf16.mxu0 0
    %79 = vmatpush1.bf16.msra.mxu0 0
    %80 = vmatprep.subr.bf16.mxu0 0
    %81 = vmatpush1.bf16.msra.mxu0 0
    %82 = vmatprep.subr.bf16.mxu0 0
    %83 = vmatpush1.bf16.msra.mxu0 0
    %84 = vmatprep.subr.bf16.mxu0 0
    %85 = vmatpush1.bf16.msra.mxu0 0
    %86 = vmatprep.subr.bf16.mxu0 0
    %87 = vmatpush1.bf16.msra.mxu0 0
    %88 = vmatprep.mubr.bf16.mxu0 0
    %89 = vmatmul.mubr.bf16.gmra.mrb[0].mxu0 %v48
    %v90 = vpop.f32.mrb[0].mxu0
    %v91 = vadd.f32 0.0, %v90
    %v92 = vpop.f32.mrb[0].mxu0
    %v93 = vpop.f32.mrb[0].mxu0
    %v94 = vadd.f32 0.0, %v93
    %v95 = vpop.f32.mrb[0].mxu0
    %96 = vdwg.mxu0
    %v97 = vmax.f32 %v91, 0.0
    %v98 = vmax.f32 %v94, 0.0
    %v99 = vpack.c.bf16 %v98, %v97
    %v100 = vld [vmem:[%s2] sm:$0xf]
    %v101 = vld [vmem:[%s2 + $0x4] sm:$0xf]
    %v102 = vld [vmem:[%s2 + $0x8] sm:$0xf]
    %v103 = vld [vmem:[%s2 + $0xc] sm:$0xf]
    %v104 = vld [vmem:[%s2 + $0x10] sm:$0xf]
    %v105 = vld [vmem:[%s2 + $0x14] sm:$0xf]
    %v106 = vld [vmem:[%s2 + $0x18] sm:$0xf]
    %v107 = vld [vmem:[%s2 + $0x1c] sm:$0xf]
    %v108 = vld [vmem:[%s2 + $0x20] sm:$0x1]
    %v118 = vunpack.c.l.b16 %v100
    %v119 = vunpack.c.l.b16 %v101
    %v120 = vunpack.c.l.b16 %v102
    %v121 = vunpack.c.l.b16 %v103
    %v122 = vunpack.c.l.b16 %v104
    %v123 = vunpack.c.l.b16 %v105
    %v124 = vunpack.c.l.b16 %v106
    %v125 = vunpack.c.l.b16 %v107
    %v126 = vunpack.c.l.b16 %v108
    %v127 = vpack.c.b16 %v119, %v118
    %v128 = vpack.c.b16 %v121, %v120
    %v129 = vpack.c.b16 %v123, %v122
    %v130 = vpack.c.b16 %v125, %v124
    %v131 = vpack.c.b16 %v126, %v126
    %vm136 = vcmask 531456
    %v138 = vsel %vm136, %v99, 0
    %v141 = vand.u32 %v131, %v52
    %143 = vmatprep.subr.bf16.mxu0 0
    %144 = vmatpush1.bf16.msra.mxu0 %v127
    %145 = vmatprep.subr.bf16.mxu0 0
    %146 = vmatpush1.bf16.msra.mxu0 %v128
    %147 = vmatprep.subr.bf16.mxu0 0
    %148 = vmatpush1.bf16.msra.mxu0 %v129
    %149 = vmatprep.subr.bf16.mxu0 0
    %150 = vmatpush1.bf16.msra.mxu0 %v130
    %151 = vmatprep.subr.bf16.mxu0 0
    %152 = vmatpush1.bf16.msra.mxu0 %v141
    %153 = vmatprep.subr.bf16.mxu0 0
    %154 = vmatpush1.bf16.msra.mxu0 0
    %155 = vmatprep.subr.bf16.mxu0 0
    %156 = vmatpush1.bf16.msra.mxu0 0
    %157 = vmatprep.subr.bf16.mxu0 0
    %158 = vmatpush1.bf16.msra.mxu0 0
    %159 = vmatprep.subr.bf16.mxu0 0
    %160 = vmatpush1.bf16.msra.mxu0 0
    %161 = vmatprep.subr.bf16.mxu0 0
    %162 = vmatpush1.bf16.msra.mxu0 0
    %163 = vmatprep.subr.bf16.mxu0 0
    %164 = vmatpush1.bf16.msra.mxu0 0
    %165 = vmatprep.subr.bf16.mxu0 0
    %166 = vmatpush1.bf16.msra.mxu0 0
    %167 = vmatprep.subr.bf16.mxu0 0
    %168 = vmatpush1.bf16.msra.mxu0 0
    %169 = vmatprep.subr.bf16.mxu0 0
    %170 = vmatpush1.bf16.msra.mxu0 0
    %171 = vmatprep.subr.bf16.mxu0 0
    %172 = vmatpush1.bf16.msra.mxu0 0
    %173 = vmatprep.subr.bf16.mxu0 0
    %174 = vmatpush1.bf16.msra.mxu0 0
    %175 = vmatprep.mubr.bf16.mxu0 0
    %176 = vmatmul.mubr.bf16.gmra.mrb[0].mxu0 %v138
    %v177 = vpop.f32.mrb[0].mxu0
    %v178 = vadd.f32 0.0, %v177
    %v179 = vpop.f32.mrb[0].mxu0
    %v180 = vpop.f32.mrb[0].mxu0
    %v181 = vadd.f32 0.0, %v180
    %v182 = vpop.f32.mrb[0].mxu0
    %183 = vdwg.mxu0
    %185 = vrot.lane.b32.xlu0 %v181, 112
    %v186 = vpop.permute.xlu0 %185
    %vm187 = vcmask 130048
    %v189 = vsel %vm187, %v178, 0
    %v191 = vsel %vm187, %v186, 0
    %193 = vmatprep.subr.mxu0 0.0
    %194 = vmatpush1.xpose.msra.mxu0 %v191
    %195 = vmatprep.subr.mxu0 0.0
    %196 = vmatpush1.xpose.msra.mxu0 0.0
    %197 = vmatprep.subr.mxu0 0.0
    %198 = vmatpush1.xpose.msra.mxu0 0.0
    %199 = vmatprep.subr.mxu0 0.0
    %200 = vmatpush1.xpose.msra.mxu0 0.0
    %201 = vmatprep.subr.mxu0 0.0
    %202 = vmatpush1.xpose.msra.mxu0 0.0
    %203 = vmatprep.subr.mxu0 0.0
    %204 = vmatpush1.xpose.msra.mxu0 0.0
    %205 = vmatprep.subr.mxu0 0.0
    %206 = vmatpush1.xpose.msra.mxu0 0.0
    %207 = vmatprep.subr.mxu0 0.0
    %208 = vmatpush1.xpose.msra.mxu0 0.0
    %209 = vmatprep.subr.mxu0 0.0
    %210 = vmatpush1.xpose.msra.mxu0 0.0
    %211 = vmatprep.subr.mxu0 0.0
    %212 = vmatpush1.xpose.msra.mxu0 0.0
    %213 = vmatprep.subr.mxu0 0.0
    %214 = vmatpush1.xpose.msra.mxu0 0.0
    %215 = vmatprep.subr.mxu0 0.0
    %216 = vmatpush1.xpose.msra.mxu0 0.0
    %217 = vmatprep.subr.mxu0 0.0
    %218 = vmatpush1.xpose.msra.mxu0 0.0
    %219 = vmatprep.subr.mxu0 0.0
    %220 = vmatpush1.xpose.msra.mxu0 0.0
    %221 = vmatprep.subr.mxu0 0.0
    %222 = vmatpush1.xpose.msra.mxu0 0.0
    %223 = vmatprep.subr.mxu0 0.0
    %224 = vmatpush1.xpose.msra.mxu0 0.0
    %225 = vmatprep.subr.mxu0 0.0
    %226 = vmatpush1.xpose.msra.mxu0 0.0
    %227 = vmatprep.subr.mxu0 0.0
    %228 = vmatpush1.xpose.msra.mxu0 0.0
    %229 = vmatprep.subr.mxu0 0.0
    %230 = vmatpush1.xpose.msra.mxu0 0.0
    %231 = vmatprep.subr.mxu0 0.0
    %232 = vmatpush1.xpose.msra.mxu0 0.0
    %233 = vmatprep.subr.mxu0 0.0
    %234 = vmatpush1.xpose.msra.mxu0 0.0
    %235 = vmatprep.subr.mxu0 0.0
    %236 = vmatpush1.xpose.msra.mxu0 0.0
    %237 = vmatprep.subr.mxu0 0.0
    %238 = vmatpush1.xpose.msra.mxu0 0.0
    %239 = vmatprep.subr.mxu0 0.0
    %240 = vmatpush1.xpose.msra.mxu0 0.0
    %241 = vmatprep.subr.mxu0 0.0
    %242 = vmatpush1.xpose.msra.mxu0 0.0
    %243 = vmatprep.subr.mxu0 0.0
    %244 = vmatpush1.xpose.msra.mxu0 0.0
    %245 = vmatprep.subr.mxu0 0.0
    %246 = vmatpush1.xpose.msra.mxu0 0.0
    %247 = vmatprep.subr.mxu0 0.0
    %248 = vmatpush1.xpose.msra.mxu0 0.0
    %249 = vmatprep.subr.mxu0 0.0
    %250 = vmatpush1.xpose.msra.mxu0 0.0
    %251 = vmatprep.subr.mxu0 0.0
    %252 = vmatpush1.xpose.msra.mxu0 0.0
    %253 = vmatprep.subr.mxu0 0.0
    %254 = vmatpush1.xpose.msra.mxu0 0.0
    %255 = vmatprep.subr.mxu0 0.0
    %256 = vmatpush1.xpose.msra.mxu0 0.0
    %257 = vmatprep.mubr.f32.mxu0 0.0
    %258 = vmatmul.mubr.f32.gmra.mrb[0].mxu0 %v189
    %v259 = vpop.f32.mrb[0].mxu0
    %v260 = vadd.f32 0.0, %v259
    %v261 = vpop.f32.mrb[0].mxu0
    %262 = vdwg.mxu0
    %263 = vmatprep.subr.mxu0 0.0
    %264 = vmatpush1.xpose.msra.mxu0 %v189
    %265 = vmatprep.subr.mxu0 0.0
    %266 = vmatpush1.xpose.msra.mxu0 0.0
    %267 = vmatprep.subr.mxu0 0.0
    %268 = vmatpush1.xpose.msra.mxu0 0.0
    %269 = vmatprep.subr.mxu0 0.0
    %270 = vmatpush1.xpose.msra.mxu0 0.0
    %271 = vmatprep.subr.mxu0 0.0
    %272 = vmatpush1.xpose.msra.mxu0 0.0
    %273 = vmatprep.subr.mxu0 0.0
    %274 = vmatpush1.xpose.msra.mxu0 0.0
    %275 = vmatprep.subr.mxu0 0.0
    %276 = vmatpush1.xpose.msra.mxu0 0.0
    %277 = vmatprep.subr.mxu0 0.0
    %278 = vmatpush1.xpose.msra.mxu0 0.0
    %279 = vmatprep.subr.mxu0 0.0
    %280 = vmatpush1.xpose.msra.mxu0 0.0
    %281 = vmatprep.subr.mxu0 0.0
    %282 = vmatpush1.xpose.msra.mxu0 0.0
    %283 = vmatprep.subr.mxu0 0.0
    %284 = vmatpush1.xpose.msra.mxu0 0.0
    %285 = vmatprep.subr.mxu0 0.0
    %286 = vmatpush1.xpose.msra.mxu0 0.0
    %287 = vmatprep.subr.mxu0 0.0
    %288 = vmatpush1.xpose.msra.mxu0 0.0
    %289 = vmatprep.subr.mxu0 0.0
    %290 = vmatpush1.xpose.msra.mxu0 0.0
    %291 = vmatprep.subr.mxu0 0.0
    %292 = vmatpush1.xpose.msra.mxu0 0.0
    %293 = vmatprep.subr.mxu0 0.0
    %294 = vmatpush1.xpose.msra.mxu0 0.0
    %295 = vmatprep.subr.mxu0 0.0
    %296 = vmatpush1.xpose.msra.mxu0 0.0
    %297 = vmatprep.subr.mxu0 0.0
    %298 = vmatpush1.xpose.msra.mxu0 0.0
    %299 = vmatprep.subr.mxu0 0.0
    %300 = vmatpush1.xpose.msra.mxu0 0.0
    %301 = vmatprep.subr.mxu0 0.0
    %302 = vmatpush1.xpose.msra.mxu0 0.0
    %303 = vmatprep.subr.mxu0 0.0
    %304 = vmatpush1.xpose.msra.mxu0 0.0
    %305 = vmatprep.subr.mxu0 0.0
    %306 = vmatpush1.xpose.msra.mxu0 0.0
    %307 = vmatprep.subr.mxu0 0.0
    %308 = vmatpush1.xpose.msra.mxu0 0.0
    %309 = vmatprep.subr.mxu0 0.0
    %310 = vmatpush1.xpose.msra.mxu0 0.0
    %311 = vmatprep.subr.mxu0 0.0
    %312 = vmatpush1.xpose.msra.mxu0 0.0
    %313 = vmatprep.subr.mxu0 0.0
    %314 = vmatpush1.xpose.msra.mxu0 0.0
    %315 = vmatprep.subr.mxu0 0.0
    %316 = vmatpush1.xpose.msra.mxu0 0.0
    %317 = vmatprep.subr.mxu0 0.0
    %318 = vmatpush1.xpose.msra.mxu0 0.0
    %319 = vmatprep.subr.mxu0 0.0
    %320 = vmatpush1.xpose.msra.mxu0 0.0
    %321 = vmatprep.subr.mxu0 0.0
    %322 = vmatpush1.xpose.msra.mxu0 0.0
    %323 = vmatprep.subr.mxu0 0.0
    %324 = vmatpush1.xpose.msra.mxu0 0.0
    %325 = vmatprep.subr.mxu0 0.0
    %326 = vmatpush1.xpose.msra.mxu0 0.0
    %327 = vmatprep.mubr.f32.mxu0 0.0
    %328 = vmatmul.mubr.f32.gmra.mrb[0].mxu0 %v191
    %v329 = vpop.f32.mrb[0].mxu0
    %v330 = vadd.f32 0.0, %v329
    %v331 = vpop.f32.mrb[0].mxu0
    %332 = vdwg.mxu0
    %vm333 = vcmask 64512
    %v334 = vsel %vm333, %v330, -inf
    %v335 = vrot.slane %v334, 4
    %v336 = vmax.f32 %v334, %v335
    %v337 = vrot.slane %v336, 2
    %v338 = vmax.f32 %v336, %v337
    %v339 = vrot.slane %v338, 1
    %v340 = vmax.f32 %v338, %v339
    %v341 = vsub.f32 %v260, %v340
    %v342 = vld [vmem:[%s3] sm:$0xff]
    %v343 = vlaneseq
    %v344 = vshrl.u32 %v343, 7
    %v345 = vlaneseq
    %v346 = vand.u32 %v345, 127
    %347 = vset.pattern.permute.xlu0 0
    %348 = vperm.xlu0 %347, %v342
    %v349 = vpop.permute.xlu0 %348
    %vm350 = vcmp.eq.s32.totalorder %v346, %v349
    %v351 = vsel %vm350, 1.0, 0.0
    %v352 = vsel %vm333, %v351, 0.0
    %v353 = vrot.slane %v352, 4
    %v354 = vadd.f32 %v352, %v353
    %v355 = vrot.slane %v354, 2
    %v356 = vadd.f32 %v354, %v355
    %v357 = vrot.slane %v356, 1
    %v358 = vadd.f32 %v356, %v357
    %vm359 = vcmp.gt.f32.partialorder %v358, 0.0
    %vm360 = vcmp.eq.s32.totalorder %v344, %v346
    %v361 = vsel %vm360, %v358, 0.0
    %v362 = vsel %vm333, %v361, 0.0
    %363 = vadd.xlane.f32.xlu0 %v362
    %v364 = vpop.xlane.xlu0 %363
    %v365 = vsel %vm350, %v341, 0.0
    %v366 = vsel %vm333, %v365, 0.0
    %367 = vadd.xlane.f32.xlu0 %v366
    %v368 = vpop.xlane.xlu0 %367
    %v369 = vrot.slane %v368, 4
    %v370 = vadd.f32 %v368, %v369
    %v371 = vrot.slane %v370, 2
    %v372 = vadd.f32 %v370, %v371
    %v373 = vrot.slane %v372, 1
    %v374 = vadd.f32 %v372, %v373
    %s375 = vtos %v374
    %v376 = vmul.f32 %v341, 1.442695
    %v377 = vpow.pop %v376
    %v378 = vsel %vm359, %v377, 0.0
    %vm379 = vcmask 57344
    %v380 = vsel %vm379, %v378, 0.0
    %381 = vadd.xlane.f32.xlu0 %v380
    %v382 = vpop.xlane.xlu0 %381
    %v383 = vrot.slane %v382, 4
    %v384 = vadd.f32 %v382, %v383
    %v385 = vrot.slane %v384, 2
    %v386 = vadd.f32 %v384, %v385
    %v387 = vrot.slane %v386, 1
    %v388 = vadd.f32 %v386, %v387
    %s389 = vtos %v388
    %v390 = vsel %vm333, %v377, 0.0
    %391 = vadd.xlane.f32.xlu0 %v390
    %v392 = vpop.xlane.xlu0 %391
    %v393 = vrot.slane %v392, 4
    %v394 = vadd.f32 %v392, %v393
    %v395 = vrot.slane %v394, 2
    %v396 = vadd.f32 %v394, %v395
    %v397 = vrot.slane %v396, 1
    %v398 = vadd.f32 %v396, %v397
    %s399 = vtos %v398
    %s400 = ssub.f32 %s399, %s389
    %s401 = smul.f32 %s400, 0.49999976
    %v402 = vlaneseq
    %v403 = vshrl.u32 %v402, 7
    %v404 = vsub.s32 0, %v403
    %v405 = vrot.slane %v341, %v404
    %v406 = vsel %vm350, %v405, 0.0
    %v407 = vsel %vm333, %v406, 0.0
    %408 = vadd.xlane.f32.xlu0 %v407
    %v409 = vpop.xlane.xlu0 %408
    %v410 = vmul.f32 %v409, 1.442695
    %v411 = vpow.pop %v410
    %v412 = vstv %s401
    %v413 = vadd.f32 %v412, %v411
    %v414 = vlog2.pop %v413
    %v415 = vmul.f32 %v414, 0.6931472
    %v416 = vmul.f32 %v364, %v415
    %vm417 = vcmask 7168
    %v418 = vsel %vm417, %v416, 0.0
    %419 = vadd.xlane.f32.xlu0 %v418
    %v420 = vpop.xlane.xlu0 %419
    %v421 = vrot.slane %v420, 4
    %v422 = vadd.f32 %v420, %v421
    %v423 = vrot.slane %v422, 2
    %v424 = vadd.f32 %v422, %v423
    %v425 = vrot.slane %v424, 1
    %v426 = vadd.f32 %v424, %v425
    %s427 = vtos %v426
    %s428 = ssub.f32 %s375, %s427
    %s429 = smul.f32 %s428, 0.125
    %s430 = sadd.f32 %s429, 1.3862944
    %v431 = vstv %s430
    %vm432 = vcmask 0
    %433 = vst.msk [vmem:[#allocation2] sm:$0x1] %vm432, %v431
    // Predicated region
    $region18: #{mi_forward_stacked.1} parent=1 // pred_check
      _
    $region19: #{mi_forward_stacked.1} parent=1 // pred_check_branch
      %435 = sbr.rel (0) target = $region21
    $region20: #{mi_forward_stacked.1} parent=1 // pred_region
      %s437 = ssub.s32 16, 16
      %438 = vsyncadd [#allocation3], %s437
      %s440 = sshll.u32 [#allocation2], 4
      %s441 = int_to_ptr.vmem [resolvable:$true] %s440
      %443 = dma.vmem_to_hbm [thread:$0]  %s441, 16, %s4, [#allocation3]
    $region21: #{mi_forward_stacked.1} parent=1 // pred_fallthru
      _
    // Predicated region
    $region22: #{mi_forward_stacked.1} parent=1 // pred_check
      _
    $region23: #{mi_forward_stacked.1} parent=1 // pred_check_branch
      %445 = sbr.rel (0) target = $region25
    $region24: #{mi_forward_stacked.1} parent=1 // pred_region
      %446 = dma.done [#allocation3], 16
    $region25: #{mi_forward_stacked.1} parent=1 // pred_fallthru
      _
    %447 = vsyncpa [#allocation3], 1

</llo_original>
